<compile_context>
chip_gen: v7x
topology: tpu7x:2x2x1
jax: 0.10.0
libtpu: 0.0.40
codegen_flags: <defaults>
</compile_context>

<pallas_src>
import functools

import jax
import jax.numpy as jnp
from jax.experimental import pallas as pl
from jax.experimental.pallas import tpu as pltpu


def _round_up(x, m):
    return ((x + m - 1) // m) * m


def _pick_bm(batch, bm_max):
    # batch tile: multiple of 8 sublanes, clamped to the (rounded-up) batch.
    return min(bm_max, _round_up(batch, 8))


# ------------------------- Pallas kernels ---------------------------------

def _linear_kernel(x_ref, w_ref, b_ref, o_ref):
    # x: (bm, D) bf16, w: (D, O_pad) bf16, b: (1, O_pad) f32 -> o: (bm, O_pad) f32
    o_ref[...] = (
        jnp.dot(x_ref[...], w_ref[...], preferred_element_type=jnp.float32)
        + b_ref[...]
    )


def _linear_ce_kernel(x_ref, w_ref, b_ref, lab_ref,
                      logits_ref, lsum_ref, cnt_ref,
                      *, num_tasks, num_classes):
    """Fused linear + masked cross-entropy for one batch tile.

    Columns of W are class-major: col = c * num_tasks + t, zero-padded to O_pad.
    Labels: (bm, num_tasks) int32, -100 = ignore.
    Outputs: logits tile (class-major, padded) + per-tile loss-sum / valid-count
    partials (broadcast into a small lane-dense block).
    """
    T, C = num_tasks, num_classes

    logits = (
        jnp.dot(x_ref[...], w_ref[...], preferred_element_type=jnp.float32)
        + b_ref[...]
    )                                            # (bm, O_pad) f32
    logits_ref[...] = logits

    lab = lab_ref[...]                           # (bm, T) int32
    # Three (C) contiguous class slabs, each (bm, T): static lane slices.
    slabs = [logits[:, c * T:(c + 1) * T] for c in range(C)]

    m = slabs[0]
    for c in range(1, C):
        m = jnp.maximum(m, slabs[c])
    sexp = jnp.exp(slabs[0] - m)
    for c in range(1, C):
        sexp = sexp + jnp.exp(slabs[c] - m)
    lse = m + jnp.log(sexp)                      # (bm, T)

    true_logit = jnp.zeros_like(m)
    for c in range(C):
        true_logit = jnp.where(lab == c, slabs[c], true_logit)

    valid = lab != -100                          # F.cross_entropy ignore_index
    per_ex = jnp.where(valid, lse - true_logit, 0.0)
    loss_sum = jnp.sum(per_ex)
    count = jnp.sum(valid.astype(jnp.float32))

    lsum_ref[...] = jnp.broadcast_to(loss_sum, lsum_ref.shape)
    cnt_ref[...] = jnp.broadcast_to(count, cnt_ref.shape)


# ------------------------- jitted wrappers ----------------------------------

@functools.partial(jax.jit, static_argnames=("num_tasks", "num_classes", "bm_max"))
def linear_probe_logits(x, w_cm, b_cm, *, num_tasks, num_classes, bm_max=256):
    B, D = x.shape
    O_pad = w_cm.shape[1]
    T, C = num_tasks, num_classes
    bm = _pick_bm(B, bm_max)
    B_pad = _round_up(B, bm)

    x_bf = x.astype(jnp.bfloat16)
    if B_pad != B:
        x_bf = jnp.pad(x_bf, ((0, B_pad - B), (0, 0)))

    logits_cm = pl.pallas_call(
        _linear_kernel,
        out_shape=jax.ShapeDtypeStruct((B_pad, O_pad), jnp.float32),
        grid_spec=pltpu.PrefetchScalarGridSpec(
            num_scalar_prefetch=0,
            grid=(B_pad // bm,),
            in_specs=[
                pl.BlockSpec((bm, D), lambda i: (i, 0)),     # batch-tiled x (bf16)
                pl.BlockSpec((D, O_pad), lambda i: (0, 0)),  # resident W (bf16)
                pl.BlockSpec((1, O_pad), lambda i: (0, 0)),  # resident bias (f32)
            ],
            out_specs=pl.BlockSpec((bm, O_pad), lambda i: (i, 0)),
        ),
        compiler_params=pltpu.CompilerParams(
            dimension_semantics=("parallel",)),
    )(x_bf, w_cm, b_cm)

    logits_cm = logits_cm[:B, :C * T]
    return logits_cm.reshape(B, C, T).transpose(0, 2, 1)     # (B, T, C)


@functools.partial(jax.jit, static_argnames=("num_tasks", "num_classes", "bm_max"))
def linear_probe_logits_and_loss(x, w_cm, b_cm, labels, *,
                                 num_tasks, num_classes, bm_max=256):
    B, D = x.shape
    O_pad = w_cm.shape[1]
    T, C = num_tasks, num_classes
    bm = _pick_bm(B, bm_max)
    B_pad = _round_up(B, bm)
    n_tiles = B_pad // bm

    x_bf = x.astype(jnp.bfloat16)
    lab = labels.reshape(-1, T).astype(jnp.int32)
    if B_pad != B:
        x_bf = jnp.pad(x_bf, ((0, B_pad - B), (0, 0)))
        lab = jnp.pad(lab, ((0, B_pad - B), (0, 0)), constant_values=-100)

    kernel = functools.partial(_linear_ce_kernel,
                               num_tasks=T, num_classes=C)

    logits_cm, lsum, cnt = pl.pallas_call(
        kernel,
        out_shape=(
            jax.ShapeDtypeStruct((B_pad, O_pad), jnp.float32),
            jax.ShapeDtypeStruct((n_tiles, 8, 128), jnp.float32),
            jax.ShapeDtypeStruct((n_tiles, 8, 128), jnp.float32),
        ),
        grid_spec=pltpu.PrefetchScalarGridSpec(
            num_scalar_prefetch=0,
            grid=(n_tiles,),
            in_specs=[
                pl.BlockSpec((bm, D), lambda i: (i, 0)),      # x tile (bf16)
                pl.BlockSpec((D, O_pad), lambda i: (0, 0)),   # W (bf16, class-major)
                pl.BlockSpec((1, O_pad), lambda i: (0, 0)),   # bias (f32)
                pl.BlockSpec((bm, T), lambda i: (i, 0)),      # labels tile (int32)
            ],
            out_specs=[
                pl.BlockSpec((bm, O_pad), lambda i: (i, 0)),
                pl.BlockSpec((1, 8, 128), lambda i: (i, 0, 0)),
                pl.BlockSpec((1, 8, 128), lambda i: (i, 0, 0)),
            ],
        ),
        compiler_params=pltpu.CompilerParams(
            dimension_semantics=("parallel",)),
    )(x_bf, w_cm, b_cm, lab)

    logits_cm = logits_cm[:B, :C * T]
    logits = logits_cm.reshape(B, C, T).transpose(0, 2, 1)    # (B, T, C)
    # Mean over non-ignored rows (matches F.cross_entropy: NaN if all ignored).
    loss = jnp.sum(lsum[:, 0, 0]) / jnp.sum(cnt[:, 0, 0])
    return logits, loss


# ------------------------- Module wrapper ----------------------------------

class LinearProbePallas:
    """JAX/Pallas equivalent of the PyTorch LinearProbe module."""

    def __init__(self, key, input_dim=512, num_classes=3, num_tasks=81,
                 bm_max=256):
        self.input_dim = input_dim
        self.num_classes = num_classes
        self.num_tasks = num_tasks
        self.bm_max = bm_max
        out_dim = num_classes * num_tasks

        kw, kb = jax.random.split(key)
        bound = 1.0 / (input_dim ** 0.5)
        # Canonical (task-major) params, == nn.Linear weight.T / bias.
        self.w = jax.random.uniform(kw, (input_dim, out_dim), jnp.float32,
                                    -bound, bound)
        self.b = jax.random.uniform(kb, (out_dim,), jnp.float32, -bound, bound)

        # Kernel params: class-major columns (col = c*T + t), zero-padded to a
        # multiple of 128 lanes, W in bf16, bias in f32.
        o_pad = _round_up(out_dim, 128)
        w_cm = jnp.transpose(
            self.w.reshape(input_dim, num_tasks, num_classes), (0, 2, 1)
        ).reshape(input_dim, out_dim)
        self.w_cm = jnp.pad(w_cm, ((0, 0), (0, o_pad - out_dim))
                            ).astype(jnp.bfloat16)
        b_cm = jnp.transpose(
            self.b.reshape(num_tasks, num_classes), (1, 0)).reshape(out_dim)
        self.b_cm = jnp.pad(b_cm, (0, o_pad - out_dim)
                            ).astype(jnp.float32).reshape(1, o_pad)

    def __call__(self, input_features, labels=None):
        if labels is None:
            logits = linear_probe_logits(
                input_features, self.w_cm, self.b_cm,
                num_tasks=self.num_tasks, num_classes=self.num_classes,
                bm_max=self.bm_max)
            return {"logits": logits}
        logits, loss = linear_probe_logits_and_loss(
            input_features, self.w_cm, self.b_cm, labels,
            num_tasks=self.num_tasks, num_classes=self.num_classes,
            bm_max=self.bm_max)
        return {"loss": loss, "logits": logits}


# ------------------------------ Demo ---------------------------------------

if __name__ == "__main__":
    INPUT_DIM = 512
    NUM_CLASSES = 3
    NUM_TASKS = 81
    BATCH = 8

    key = jax.random.PRNGKey(0)
    k_params, k_x, k_lab = jax.random.split(key, 3)

    probe = LinearProbePallas(k_params, input_dim=INPUT_DIM,
                              num_classes=NUM_CLASSES, num_tasks=NUM_TASKS)

    x = jax.random.normal(k_x, (BATCH, INPUT_DIM), dtype=jnp.float32)
    labels = jax.random.randint(k_lab, (BATCH, NUM_TASKS), 0, NUM_CLASSES)
    labels = labels.at[0, 0].set(-100)  # exercise ignore_index
    labels = labels.at[3, 7].set(-100)

    out = probe(x, labels)
    logits = jax.block_until_ready(out["logits"])
    loss = jax.block_until_ready(out["loss"])

    out_nl = probe(x)
    logits_nl = jax.block_until_ready(out_nl["logits"])

    # Reference in plain JAX with the same bf16-input / f32-accumulate numerics.
    ref_flat = jnp.dot(x.astype(jnp.bfloat16), probe.w.astype(jnp.bfloat16),
                       preferred_element_type=jnp.float32) + probe.b
    ref_logits = ref_flat.reshape(-1, NUM_TASKS, NUM_CLASSES)
    lf = ref_logits.reshape(-1, NUM_CLASSES)
    lb = labels.reshape(-1)
    lse = jax.scipy.special.logsumexp(lf, axis=-1)
    true_lg = jnp.take_along_axis(
        lf, jnp.clip(lb, 0, NUM_CLASSES - 1)[:, None], axis=-1)[:, 0]
    valid = lb != -100
    ref_loss = jnp.sum(jnp.where(valid, lse - true_lg, 0.0)) / jnp.sum(valid)

    assert logits.shape == (BATCH, NUM_TASKS, NUM_CLASSES)
    assert logits_nl.shape == (BATCH, NUM_TASKS, NUM_CLASSES)
    assert jnp.allclose(logits, ref_logits, atol=1e-2, rtol=1e-2)
    assert jnp.allclose(logits_nl, ref_logits, atol=1e-2, rtol=1e-2)
    assert jnp.allclose(loss, ref_loss, atol=1e-2, rtol=1e-2)

    print("KERNEL_OK")
</pallas_src>

<mosaic_0001>
module attributes {stable_mosaic.version = 11 : i64} {
  func.func @_linear_ce_kernel(%arg0: i32, %arg1: memref<8x512xbf16, #tpu.memory_space<vmem>>, %arg2: memref<512x256xbf16, #tpu.memory_space<vmem>>, %arg3: memref<1x256xf32, #tpu.memory_space<vmem>>, %arg4: memref<8x81xi32, #tpu.memory_space<vmem>>, %arg5: memref<8x256xf32, #tpu.memory_space<vmem>>, %arg6: memref<1x8x128xf32, #tpu.memory_space<vmem>>, %arg7: memref<1x8x128xf32, #tpu.memory_space<vmem>>) attributes {dimension_semantics = [#tpu.dimension_semantics<parallel>], iteration_bounds = array<i64: 1>, scalar_prefetch = 0 : i64, scratch_operands = 0 : i64, tpu.core_type = #tpu.core_type<tc>, window_params = [{transform_indices = @transform_0, window_bounds = array<i64: 8, 512>}, {pipeline_mode = #tpu.pipeline_mode<synchronous>, transform_indices = @transform_1, window_bounds = array<i64: 512, 256>}, {pipeline_mode = #tpu.pipeline_mode<synchronous>, transform_indices = @transform_2, window_bounds = array<i64: 1, 256>}, {transform_indices = @transform_3, window_bounds = array<i64: 8, 81>}, {transform_indices = @transform_4, window_bounds = array<i64: 8, 256>}, {transform_indices = @transform_5, window_bounds = array<i64: 1, 8, 128>}, {transform_indices = @transform_6, window_bounds = array<i64: 1, 8, 128>}]} {
    %c0 = arith.constant 0 : index
    %c0_0 = arith.constant 0 : index
    %0 = vector.load %arg1[%c0, %c0_0] : memref<8x512xbf16, #tpu.memory_space<vmem>>, vector<8x512xbf16>
    %c0_1 = arith.constant 0 : index
    %c0_2 = arith.constant 0 : index
    %1 = vector.load %arg2[%c0_1, %c0_2] : memref<512x256xbf16, #tpu.memory_space<vmem>>, vector<512x256xbf16>
    %cst = arith.constant dense<0.000000e+00> : vector<8x256xf32>
    %2 = tpu.matmul %0, %1, %cst {dimension_numbers = #tpu.dot_dimension_numbers<[1], [0], [0], [1], [0, 0, 1, 1], [], []>} : vector<8x512xbf16>, vector<512x256xbf16>, vector<8x256xf32> -> vector<8x256xf32>
    %c0_3 = arith.constant 0 : index
    %c0_4 = arith.constant 0 : index
    %3 = vector.load %arg3[%c0_3, %c0_4] : memref<1x256xf32, #tpu.memory_space<vmem>>, vector<1x256xf32>
    %4 = vector.broadcast %3 : vector<1x256xf32> to vector<8x256xf32>
    %5 = arith.addf %2, %4 : vector<8x256xf32>
    %c0_5 = arith.constant 0 : index
    %c0_6 = arith.constant 0 : index
    %6 = vector.load %arg5[%c0_5, %c0_6] : memref<8x256xf32, #tpu.memory_space<vmem>>, vector<8x256xf32>
    tpu.vector_store %arg5[%c0_5, %c0_6], %5 {strides = array<i32>} : memref<8x256xf32, #tpu.memory_space<vmem>>, vector<8x256xf32>,
    %c0_7 = arith.constant 0 : index
    %c0_8 = arith.constant 0 : index
    %7 = vector.load %arg4[%c0_7, %c0_8] : memref<8x81xi32, #tpu.memory_space<vmem>>, vector<8x81xi32>
    %8 = vector.extract_strided_slice %5 {offsets = [0, 0], sizes = [8, 81], strides = [1, 1]} : vector<8x256xf32> to vector<8x81xf32>
    %9 = vector.extract_strided_slice %5 {offsets = [0, 81], sizes = [8, 81], strides = [1, 1]} : vector<8x256xf32> to vector<8x81xf32>
    %10 = vector.extract_strided_slice %5 {offsets = [0, 162], sizes = [8, 81], strides = [1, 1]} : vector<8x256xf32> to vector<8x81xf32>
    %11 = arith.maximumf %8, %9 : vector<8x81xf32>
    %12 = arith.maximumf %11, %10 : vector<8x81xf32>
    %13 = arith.subf %8, %12 : vector<8x81xf32>
    %14 = math.exp %13 : vector<8x81xf32>
    %15 = arith.subf %9, %12 : vector<8x81xf32>
    %16 = math.exp %15 : vector<8x81xf32>
    %17 = arith.addf %14, %16 : vector<8x81xf32>
    %18 = arith.subf %10, %12 : vector<8x81xf32>
    %19 = math.exp %18 : vector<8x81xf32>
    %20 = arith.addf %17, %19 : vector<8x81xf32>
    %21 = math.log %20 : vector<8x81xf32>
    %22 = arith.addf %12, %21 : vector<8x81xf32>
    %cst_9 = arith.constant 0.000000e+00 : f32
    %23 = vector.broadcast %cst_9 : f32 to vector<8x81xf32>
    %c0_i32 = arith.constant 0 : i32
    %24 = vector.broadcast %c0_i32 : i32 to vector<8x81xi32>
    %25 = arith.cmpi eq, %7, %24 : vector<8x81xi32>
    %26 = arith.select %25, %8, %23 : vector<8x81xi1>, vector<8x81xf32>
    %c1_i32 = arith.constant 1 : i32
    %27 = vector.broadcast %c1_i32 : i32 to vector<8x81xi32>
    %28 = arith.cmpi eq, %7, %27 : vector<8x81xi32>
    %29 = arith.select %28, %9, %26 : vector<8x81xi1>, vector<8x81xf32>
    %c2_i32 = arith.constant 2 : i32
    %30 = vector.broadcast %c2_i32 : i32 to vector<8x81xi32>
    %31 = arith.cmpi eq, %7, %30 : vector<8x81xi32>
    %32 = arith.select %31, %10, %29 : vector<8x81xi1>, vector<8x81xf32>
    %c-100_i32 = arith.constant -100 : i32
    %33 = vector.broadcast %c-100_i32 : i32 to vector<8x81xi32>
    %34 = arith.cmpi ne, %7, %33 : vector<8x81xi32>
    %35 = arith.subf %22, %32 : vector<8x81xf32>
    %cst_10 = arith.constant 0.000000e+00 : f32
    %36 = vector.broadcast %cst_10 : f32 to vector<8x81xf32>
    %37 = arith.select %34, %35, %36 : vector<8x81xi1>, vector<8x81xf32>
    %38 = vector.shape_cast %37 : vector<8x81xf32> to vector<1x8x81xf32>
    %cst_11 = arith.constant dense<0.000000e+00> : vector<1xf32>
    %39 = vector.multi_reduction <add>, %38, %cst_11 [1, 2] : vector<1x8x81xf32> to vector<1xf32>
    %40 = vector.shape_cast %39 : vector<1xf32> to vector<1x1x1xf32>
    %41 = vector.extract %40[0, 0, 0] : f32 from vector<1x1x1xf32>
    %42 = arith.extui %34 : vector<8x81xi1> to vector<8x81xi32>
    %43 = arith.sitofp %42 : vector<8x81xi32> to vector<8x81xf32>
    %44 = vector.shape_cast %43 : vector<8x81xf32> to vector<1x8x81xf32>
    %cst_12 = arith.constant dense<0.000000e+00> : vector<1xf32>
    %45 = vector.multi_reduction <add>, %44, %cst_12 [1, 2] : vector<1x8x81xf32> to vector<1xf32>
    %46 = vector.shape_cast %45 : vector<1xf32> to vector<1x1x1xf32>
    %47 = vector.extract %46[0, 0, 0] : f32 from vector<1x1x1xf32>
    %48 = vector.broadcast %41 : f32 to vector<1x8x128xf32>
    %c0_13 = arith.constant 0 : index
    %c0_14 = arith.constant 0 : index
    %c0_15 = arith.constant 0 : index
    %49 = vector.load %arg6[%c0_13, %c0_14, %c0_15] : memref<1x8x128xf32, #tpu.memory_space<vmem>>, vector<1x8x128xf32>
    tpu.vector_store %arg6[%c0_13, %c0_14, %c0_15], %48 {strides = array<i32>} : memref<1x8x128xf32, #tpu.memory_space<vmem>>, vector<1x8x128xf32>,
    %50 = vector.broadcast %47 : f32 to vector<1x8x128xf32>
    %c0_16 = arith.constant 0 : index
    %c0_17 = arith.constant 0 : index
    %c0_18 = arith.constant 0 : index
    %51 = vector.load %arg7[%c0_16, %c0_17, %c0_18] : memref<1x8x128xf32, #tpu.memory_space<vmem>>, vector<1x8x128xf32>
    tpu.vector_store %arg7[%c0_16, %c0_17, %c0_18], %50 {strides = array<i32>} : memref<1x8x128xf32, #tpu.memory_space<vmem>>, vector<1x8x128xf32>,
    return
  }
  func.func @transform_0(%arg0: i32) -> (i32, i32) {
    %c0_i32 = arith.constant 0 : i32
    %c0_i32_0 = arith.constant 0 : i32
    return %arg0, %c0_i32 : i32, i32
  }
  func.func @transform_1(%arg0: i32) -> (i32, i32) {
    %c0_i32 = arith.constant 0 : i32
    %c0_i32_0 = arith.constant 0 : i32
    %c0_i32_1 = arith.constant 0 : i32
    return %c0_i32, %c0_i32_0 : i32, i32
  }
  func.func @transform_2(%arg0: i32) -> (i32, i32) {
    %c0_i32 = arith.constant 0 : i32
    %c0_i32_0 = arith.constant 0 : i32
    %c0_i32_1 = arith.constant 0 : i32
    return %c0_i32, %c0_i32_0 : i32, i32
  }
  func.func @transform_3(%arg0: i32) -> (i32, i32) {
    %c0_i32 = arith.constant 0 : i32
    %c0_i32_0 = arith.constant 0 : i32
    return %arg0, %c0_i32 : i32, i32
  }
  func.func @transform_4(%arg0: i32) -> (i32, i32) {
    %c0_i32 = arith.constant 0 : i32
    %c0_i32_0 = arith.constant 0 : i32
    return %arg0, %c0_i32 : i32, i32
  }
  func.func @transform_5(%arg0: i32) -> (i32, i32, i32) {
    %c0_i32 = arith.constant 0 : i32
    %c0_i32_0 = arith.constant 0 : i32
    %c0_i32_1 = arith.constant 0 : i32
    return %arg0, %c0_i32, %c0_i32_0 : i32, i32, i32
  }
  func.func @transform_6(%arg0: i32) -> (i32, i32, i32) {
    %c0_i32 = arith.constant 0 : i32
    %c0_i32_0 = arith.constant 0 : i32
    %c0_i32_1 = arith.constant 0 : i32
    return %arg0, %c0_i32, %c0_i32_0 : i32, i32, i32
  }
}

</mosaic_0001>

<llo_original>
// kernel: linear_probe_logits_and_loss.1
$region0: #{linear_probe_logits_and_loss.1}
  #allocation0 [shape = 'u32[]', space=smem, size = 0x4, offset = 0x4, fixed_abs, tag = 'smem constant byte address 0x4 - core index']
  #allocation1 [shape = 'u32[144,128]{1,0:T(1,128)}', space=vmem, size = 0x12000, scoped, tag = 'internal scratch']
  %s0 = inlined_call_operand.vmem [shape: bf16[8,512], index: 0, kind: input, shape index: {}]
  %s1 = inlined_call_operand.hbm [shape: bf16[512,256], index: 1, kind: input, shape index: {}]
  %s2 = inlined_call_operand.vmem [shape: f32[1,256], index: 2, kind: input, shape index: {}]
  %s3 = inlined_call_operand.vmem [shape: s32[8,81], index: 3, kind: input, shape index: {}]
  %s4 = inlined_call_operand.vmem [shape: f32[8,256], index: 4, kind: output, shape index: {0}]
  %s5 = inlined_call_operand.vmem [shape: f32[1,8,128], index: 5, kind: output, shape index: {1}]
  %s6 = inlined_call_operand.vmem [shape: f32[1,8,128], index: 6, kind: output, shape index: {2}]
  %7 = xla_tuple %s4, %s5, %s6
  %s8 = sld [smem:[#allocation0]]
  $region46: #{linear_probe_logits_and_loss.1} parent=0
    _
  %s10 = ssub.s32 1, %s8
  %s11 = scalar_select 0, %s10, %s8
  $region1: #{linear_probe_logits_and_loss.1} parent=0
    #allocation2 [shape = 'u8[262144]{0}', space=vmem, size = 0x40000, scoped, tag = 'input window, operand 1, single buffered']
    #allocation3 [shape = 's32[1]{0}', space=sflag, size = 0x4, scoped, tag = 'scoped memory for linear_probe_logits_and_loss.1']
    %12 = vsyncpa [#allocation3], 0
    // Predicated region
    $region2: #{linear_probe_logits_and_loss.1} parent=1 // pred_check
      _
    $region3: #{linear_probe_logits_and_loss.1} parent=1 // pred_check_branch
      %14 = sbr.rel (0) target = $region5
    $region4: #{linear_probe_logits_and_loss.1} parent=1 // pred_region
      _
    $region5: #{linear_probe_logits_and_loss.1} parent=1 // pred_fallthru
      _
    // Predicated region
    $region6: #{linear_probe_logits_and_loss.1} parent=1 // pred_check
      _
    $region7: #{linear_probe_logits_and_loss.1} parent=1 // pred_check_branch
      %16 = sbr.rel (0) target = $region9
    $region8: #{linear_probe_logits_and_loss.1} parent=1 // pred_region
      %s18 = ssub.s32 8192, 8192
      %19 = vsyncadd [#allocation3], %s18
      %s20 = sshll.u32 [#allocation2], 4
      %s21 = int_to_ptr.vmem [resolvable:$true] %s20
      %26 = dma.hbm_to_vmem [thread:$0]  %s1, 8192, %s21, [#allocation3], 128, 128, 8
    $region9: #{linear_probe_logits_and_loss.1} parent=1 // pred_fallthru
      _
    // Predicated region
    $region10: #{linear_probe_logits_and_loss.1} parent=1 // pred_check
      _
    $region11: #{linear_probe_logits_and_loss.1} parent=1 // pred_check_branch
      %28 = sbr.rel (0) target = $region13
    $region12: #{linear_probe_logits_and_loss.1} parent=1 // pred_region
      _
    $region13: #{linear_probe_logits_and_loss.1} parent=1 // pred_fallthru
      _
    // Predicated region
    $region14: #{linear_probe_logits_and_loss.1} parent=1 // pred_check
      _
    $region15: #{linear_probe_logits_and_loss.1} parent=1 // pred_check_branch
      %30 = sbr.rel (0) target = $region17
    $region16: #{linear_probe_logits_and_loss.1} parent=1 // pred_region
      _
    $region17: #{linear_probe_logits_and_loss.1} parent=1 // pred_fallthru
      _
    // Predicated region
    $region18: #{linear_probe_logits_and_loss.1} parent=1 // pred_check
      _
    $region19: #{linear_probe_logits_and_loss.1} parent=1 // pred_check_branch
      %32 = sbr.rel (0) target = $region21
    $region20: #{linear_probe_logits_and_loss.1} parent=1 // pred_region
      %33 = dma.done [#allocation3], 8192
    $region21: #{linear_probe_logits_and_loss.1} parent=1 // pred_fallthru
      _
    %v34 = vld [vmem:[%s0] sm:$0xff]
    %v35 = vld [vmem:[%s0 + $0x8] sm:$0xff]
    %v36 = vld [vmem:[#allocation2] sm:$0xff]
    %v37 = vld [vmem:[#allocation2 + $0x8] sm:$0xff]
    %v38 = vld [vmem:[#allocation2 + $0x10] sm:$0xff]
    %v39 = vld [vmem:[#allocation2 + $0x18] sm:$0xff]
    %v40 = vld [vmem:[#allocation2 + $0x20] sm:$0xff]
    %v41 = vld [vmem:[#allocation2 + $0x28] sm:$0xff]
    %v42 = vld [vmem:[#allocation2 + $0x30] sm:$0xff]
    %v43 = vld [vmem:[#allocation2 + $0x38] sm:$0xff]
    %v44 = vld [vmem:[#allocation2 + $0x40] sm:$0xff]
    %v45 = vld [vmem:[#allocation2 + $0x48] sm:$0xff]
    %v46 = vld [vmem:[#allocation2 + $0x50] sm:$0xff]
    %v47 = vld [vmem:[#allocation2 + $0x58] sm:$0xff]
    %v48 = vld [vmem:[#allocation2 + $0x60] sm:$0xff]
    %v49 = vld [vmem:[#allocation2 + $0x68] sm:$0xff]
    %v50 = vld [vmem:[#allocation2 + $0x70] sm:$0xff]
    %v51 = vld [vmem:[#allocation2 + $0x78] sm:$0xff]
    %v52 = vld [vmem:[#allocation2 + $0x80] sm:$0xff]
    %v53 = vld [vmem:[#allocation2 + $0x88] sm:$0xff]
    %v54 = vld [vmem:[#allocation2 + $0x90] sm:$0xff]
    %v55 = vld [vmem:[#allocation2 + $0x98] sm:$0xff]
    %v56 = vld [vmem:[#allocation2 + $0xa0] sm:$0xff]
    %v57 = vld [vmem:[#allocation2 + $0xa8] sm:$0xff]
    %v58 = vld [vmem:[#allocation2 + $0xb0] sm:$0xff]
    %v59 = vld [vmem:[#allocation2 + $0xb8] sm:$0xff]
    %v60 = vld [vmem:[#allocation2 + $0xc0] sm:$0xff]
    %v61 = vld [vmem:[#allocation2 + $0xc8] sm:$0xff]
    %v62 = vld [vmem:[#allocation2 + $0xd0] sm:$0xff]
    %v63 = vld [vmem:[#allocation2 + $0xd8] sm:$0xff]
    %v64 = vld [vmem:[#allocation2 + $0xe0] sm:$0xff]
    %v65 = vld [vmem:[#allocation2 + $0xe8] sm:$0xff]
    %v66 = vld [vmem:[#allocation2 + $0xf0] sm:$0xff]
    %v67 = vld [vmem:[#allocation2 + $0xf8] sm:$0xff]
    %v68 = vld [vmem:[#allocation2 + $0x100] sm:$0xff]
    %v69 = vld [vmem:[#allocation2 + $0x108] sm:$0xff]
    %v70 = vld [vmem:[#allocation2 + $0x110] sm:$0xff]
    %v71 = vld [vmem:[#allocation2 + $0x118] sm:$0xff]
    %v72 = vld [vmem:[#allocation2 + $0x120] sm:$0xff]
    %v73 = vld [vmem:[#allocation2 + $0x128] sm:$0xff]
    %v74 = vld [vmem:[#allocation2 + $0x130] sm:$0xff]
    %v75 = vld [vmem:[#allocation2 + $0x138] sm:$0xff]
    %v76 = vld [vmem:[#allocation2 + $0x140] sm:$0xff]
    %v77 = vld [vmem:[#allocation2 + $0x148] sm:$0xff]
    %v78 = vld [vmem:[#allocation2 + $0x150] sm:$0xff]
    %v79 = vld [vmem:[#allocation2 + $0x158] sm:$0xff]
    %v80 = vld [vmem:[#allocation2 + $0x160] sm:$0xff]
    %v81 = vld [vmem:[#allocation2 + $0x168] sm:$0xff]
    %v82 = vld [vmem:[#allocation2 + $0x170] sm:$0xff]
    %v83 = vld [vmem:[#allocation2 + $0x178] sm:$0xff]
    %v84 = vld [vmem:[#allocation2 + $0x180] sm:$0xff]
    %v85 = vld [vmem:[#allocation2 + $0x188] sm:$0xff]
    %v86 = vld [vmem:[#allocation2 + $0x190] sm:$0xff]
    %v87 = vld [vmem:[#allocation2 + $0x198] sm:$0xff]
    %v88 = vld [vmem:[#allocation2 + $0x1a0] sm:$0xff]
    %v89 = vld [vmem:[#allocation2 + $0x1a8] sm:$0xff]
    %v90 = vld [vmem:[#allocation2 + $0x1b0] sm:$0xff]
    %v91 = vld [vmem:[#allocation2 + $0x1b8] sm:$0xff]
    %v92 = vld [vmem:[#allocation2 + $0x1c0] sm:$0xff]
    %v93 = vld [vmem:[#allocation2 + $0x1c8] sm:$0xff]
    %v94 = vld [vmem:[#allocation2 + $0x1d0] sm:$0xff]
    %v95 = vld [vmem:[#allocation2 + $0x1d8] sm:$0xff]
    %v96 = vld [vmem:[#allocation2 + $0x1e0] sm:$0xff]
    %v97 = vld [vmem:[#allocation2 + $0x1e8] sm:$0xff]
    %v98 = vld [vmem:[#allocation2 + $0x1f0] sm:$0xff]
    %v99 = vld [vmem:[#allocation2 + $0x1f8] sm:$0xff]
    %v100 = vld [vmem:[%s2] sm:$0x3]
    %v102 = vlaneseq
    %v103 = vshrl.u32 %v102, 7
    %v104 = vsub.s32 0, %v103
    %v105 = vrot.slane %v100, %v104
    %v106 = vlaneseq
    %v107 = vshrl.u32 %v106, 7
    %v108 = vsub.s32 1, %v107
    %v109 = vrot.slane %v100, %v108
    %v114 = vunpack.c.l.b16 %v34
    %v115 = vunpack.c.h.b16 %v34
    %v116 = vunpack.c.l.b16 %v35
    %v117 = vunpack.c.h.b16 %v35
    %v118 = vpack.c.b16 %v114, %v114
    %v119 = vpack.c.b16 %v115, %v115
    %v120 = vpack.c.b16 %v116, %v116
    %v121 = vpack.c.b16 %v117, %v117
    %v190 = vunpack.c.l.b16 %v36
    %v191 = vunpack.c.h.b16 %v36
    %v192 = vunpack.c.l.b16 %v37
    %v193 = vunpack.c.h.b16 %v37
    %v194 = vunpack.c.l.b16 %v38
    %v195 = vunpack.c.h.b16 %v38
    %v196 = vunpack.c.l.b16 %v39
    %v197 = vunpack.c.h.b16 %v39
    %v198 = vunpack.c.l.b16 %v40
    %v199 = vunpack.c.h.b16 %v40
    %v200 = vunpack.c.l.b16 %v41
    %v201 = vunpack.c.h.b16 %v41
    %v202 = vunpack.c.l.b16 %v42
    %v203 = vunpack.c.h.b16 %v42
    %v204 = vunpack.c.l.b16 %v43
    %v205 = vunpack.c.h.b16 %v43
    %v206 = vunpack.c.l.b16 %v44
    %v207 = vunpack.c.h.b16 %v44
    %v208 = vunpack.c.l.b16 %v45
    %v209 = vunpack.c.h.b16 %v45
    %v210 = vunpack.c.l.b16 %v46
    %v211 = vunpack.c.h.b16 %v46
    %v212 = vunpack.c.l.b16 %v47
    %v213 = vunpack.c.h.b16 %v47
    %v214 = vunpack.c.l.b16 %v48
    %v215 = vunpack.c.h.b16 %v48
    %v216 = vunpack.c.l.b16 %v49
    %v217 = vunpack.c.h.b16 %v49
    %v218 = vunpack.c.l.b16 %v50
    %v219 = vunpack.c.h.b16 %v50
    %v220 = vunpack.c.l.b16 %v51
    %v221 = vunpack.c.h.b16 %v51
    %v222 = vunpack.c.l.b16 %v52
    %v223 = vunpack.c.h.b16 %v52
    %v224 = vunpack.c.l.b16 %v53
    %v225 = vunpack.c.h.b16 %v53
    %v226 = vunpack.c.l.b16 %v54
    %v227 = vunpack.c.h.b16 %v54
    %v228 = vunpack.c.l.b16 %v55
    %v229 = vunpack.c.h.b16 %v55
    %v230 = vunpack.c.l.b16 %v56
    %v231 = vunpack.c.h.b16 %v56
    %v232 = vunpack.c.l.b16 %v57
    %v233 = vunpack.c.h.b16 %v57
    %v234 = vunpack.c.l.b16 %v58
    %v235 = vunpack.c.h.b16 %v58
    %v236 = vunpack.c.l.b16 %v59
    %v237 = vunpack.c.h.b16 %v59
    %v238 = vunpack.c.l.b16 %v60
    %v239 = vunpack.c.h.b16 %v60
    %v240 = vunpack.c.l.b16 %v61
    %v241 = vunpack.c.h.b16 %v61
    %v242 = vunpack.c.l.b16 %v62
    %v243 = vunpack.c.h.b16 %v62
    %v244 = vunpack.c.l.b16 %v63
    %v245 = vunpack.c.h.b16 %v63
    %v246 = vunpack.c.l.b16 %v64
    %v247 = vunpack.c.h.b16 %v64
    %v248 = vunpack.c.l.b16 %v65
    %v249 = vunpack.c.h.b16 %v65
    %v250 = vunpack.c.l.b16 %v66
    %v251 = vunpack.c.h.b16 %v66
    %v252 = vunpack.c.l.b16 %v67
    %v253 = vunpack.c.h.b16 %v67
    %v254 = vunpack.c.l.b16 %v68
    %v255 = vunpack.c.h.b16 %v68
    %v256 = vunpack.c.l.b16 %v69
    %v257 = vunpack.c.h.b16 %v69
    %v258 = vunpack.c.l.b16 %v70
    %v259 = vunpack.c.h.b16 %v70
    %v260 = vunpack.c.l.b16 %v71
    %v261 = vunpack.c.h.b16 %v71
    %v262 = vunpack.c.l.b16 %v72
    %v263 = vunpack.c.h.b16 %v72
    %v264 = vunpack.c.l.b16 %v73
    %v265 = vunpack.c.h.b16 %v73
    %v266 = vunpack.c.l.b16 %v74
    %v267 = vunpack.c.h.b16 %v74
    %v268 = vunpack.c.l.b16 %v75
    %v269 = vunpack.c.h.b16 %v75
    %v270 = vunpack.c.l.b16 %v76
    %v271 = vunpack.c.h.b16 %v76
    %v272 = vunpack.c.l.b16 %v77
    %v273 = vunpack.c.h.b16 %v77
    %v274 = vunpack.c.l.b16 %v78
    %v275 = vunpack.c.h.b16 %v78
    %v276 = vunpack.c.l.b16 %v79
    %v277 = vunpack.c.h.b16 %v79
    %v278 = vunpack.c.l.b16 %v80
    %v279 = vunpack.c.h.b16 %v80
    %v280 = vunpack.c.l.b16 %v81
    %v281 = vunpack.c.h.b16 %v81
    %v282 = vunpack.c.l.b16 %v82
    %v283 = vunpack.c.h.b16 %v82
    %v284 = vunpack.c.l.b16 %v83
    %v285 = vunpack.c.h.b16 %v83
    %v286 = vunpack.c.l.b16 %v84
    %v287 = vunpack.c.h.b16 %v84
    %v288 = vunpack.c.l.b16 %v85
    %v289 = vunpack.c.h.b16 %v85
    %v290 = vunpack.c.l.b16 %v86
    %v291 = vunpack.c.h.b16 %v86
    %v292 = vunpack.c.l.b16 %v87
    %v293 = vunpack.c.h.b16 %v87
    %v294 = vunpack.c.l.b16 %v88
    %v295 = vunpack.c.h.b16 %v88
    %v296 = vunpack.c.l.b16 %v89
    %v297 = vunpack.c.h.b16 %v89
    %v298 = vunpack.c.l.b16 %v90
    %v299 = vunpack.c.h.b16 %v90
    %v300 = vunpack.c.l.b16 %v91
    %v301 = vunpack.c.h.b16 %v91
    %v302 = vunpack.c.l.b16 %v92
    %v303 = vunpack.c.h.b16 %v92
    %v304 = vunpack.c.l.b16 %v93
    %v305 = vunpack.c.h.b16 %v93
    %v306 = vunpack.c.l.b16 %v94
    %v307 = vunpack.c.h.b16 %v94
    %v308 = vunpack.c.l.b16 %v95
    %v309 = vunpack.c.h.b16 %v95
    %v310 = vunpack.c.l.b16 %v96
    %v311 = vunpack.c.h.b16 %v96
    %v312 = vunpack.c.l.b16 %v97
    %v313 = vunpack.c.h.b16 %v97
    %v314 = vunpack.c.l.b16 %v98
    %v315 = vunpack.c.h.b16 %v98
    %v316 = vunpack.c.l.b16 %v99
    %v317 = vunpack.c.h.b16 %v99
    %v318 = vpack.c.b16 %v192, %v190
    %v319 = vpack.c.b16 %v193, %v191
    %v320 = vpack.c.b16 %v196, %v194
    %v321 = vpack.c.b16 %v197, %v195
    %v322 = vpack.c.b16 %v200, %v198
    %v323 = vpack.c.b16 %v201, %v199
    %v324 = vpack.c.b16 %v204, %v202
    %v325 = vpack.c.b16 %v205, %v203
    %v326 = vpack.c.b16 %v208, %v206
    %v327 = vpack.c.b16 %v209, %v207
    %v328 = vpack.c.b16 %v212, %v210
    %v329 = vpack.c.b16 %v213, %v211
    %v330 = vpack.c.b16 %v216, %v214
    %v331 = vpack.c.b16 %v217, %v215
    %v332 = vpack.c.b16 %v220, %v218
    %v333 = vpack.c.b16 %v221, %v219
    %v334 = vpack.c.b16 %v224, %v222
    %v335 = vpack.c.b16 %v225, %v223
    %v336 = vpack.c.b16 %v228, %v226
    %v337 = vpack.c.b16 %v229, %v227
    %v338 = vpack.c.b16 %v232, %v230
    %v339 = vpack.c.b16 %v233, %v231
    %v340 = vpack.c.b16 %v236, %v234
    %v341 = vpack.c.b16 %v237, %v235
    %v342 = vpack.c.b16 %v240, %v238
    %v343 = vpack.c.b16 %v241, %v239
    %v344 = vpack.c.b16 %v244, %v242
    %v345 = vpack.c.b16 %v245, %v243
    %v346 = vpack.c.b16 %v248, %v246
    %v347 = vpack.c.b16 %v249, %v247
    %v348 = vpack.c.b16 %v252, %v250
    %v349 = vpack.c.b16 %v253, %v251
    %v350 = vpack.c.b16 %v256, %v254
    %v351 = vpack.c.b16 %v257, %v255
    %v352 = vpack.c.b16 %v260, %v258
    %v353 = vpack.c.b16 %v261, %v259
    %v354 = vpack.c.b16 %v264, %v262
    %v355 = vpack.c.b16 %v265, %v263
    %v356 = vpack.c.b16 %v268, %v266
    %v357 = vpack.c.b16 %v269, %v267
    %v358 = vpack.c.b16 %v272, %v270
    %v359 = vpack.c.b16 %v273, %v271
    %v360 = vpack.c.b16 %v276, %v274
    %v361 = vpack.c.b16 %v277, %v275
    %v362 = vpack.c.b16 %v280, %v278
    %v363 = vpack.c.b16 %v281, %v279
    %v364 = vpack.c.b16 %v284, %v282
    %v365 = vpack.c.b16 %v285, %v283
    %v366 = vpack.c.b16 %v288, %v286
    %v367 = vpack.c.b16 %v289, %v287
    %v368 = vpack.c.b16 %v292, %v290
    %v369 = vpack.c.b16 %v293, %v291
    %v370 = vpack.c.b16 %v296, %v294
    %v371 = vpack.c.b16 %v297, %v295
    %v372 = vpack.c.b16 %v300, %v298
    %v373 = vpack.c.b16 %v301, %v299
    %v374 = vpack.c.b16 %v304, %v302
    %v375 = vpack.c.b16 %v305, %v303
    %v376 = vpack.c.b16 %v308, %v306
    %v377 = vpack.c.b16 %v309, %v307
    %v378 = vpack.c.b16 %v312, %v310
    %v379 = vpack.c.b16 %v313, %v311
    %v380 = vpack.c.b16 %v316, %v314
    %v381 = vpack.c.b16 %v317, %v315
    %446 = vmatprep.subr.bf16.mxu0 %v319
    %447 = vmatpush1.bf16.msra.mxu0 %v318
    %448 = vmatprep.subr.bf16.mxu0 %v321
    %449 = vmatpush1.bf16.msra.mxu0 %v320
    %450 = vmatprep.subr.bf16.mxu0 %v323
    %451 = vmatpush1.bf16.msra.mxu0 %v322
    %452 = vmatprep.subr.bf16.mxu0 %v325
    %453 = vmatpush1.bf16.msra.mxu0 %v324
    %454 = vmatprep.subr.bf16.mxu0 %v327
    %455 = vmatpush1.bf16.msra.mxu0 %v326
    %456 = vmatprep.subr.bf16.mxu0 %v329
    %457 = vmatpush1.bf16.msra.mxu0 %v328
    %458 = vmatprep.subr.bf16.mxu0 %v331
    %459 = vmatpush1.bf16.msra.mxu0 %v330
    %460 = vmatprep.subr.bf16.mxu0 %v333
    %461 = vmatpush1.bf16.msra.mxu0 %v332
    %462 = vmatprep.subr.bf16.mxu0 %v335
    %463 = vmatpush1.bf16.msra.mxu0 %v334
    %464 = vmatprep.subr.bf16.mxu0 %v337
    %465 = vmatpush1.bf16.msra.mxu0 %v336
    %466 = vmatprep.subr.bf16.mxu0 %v339
    %467 = vmatpush1.bf16.msra.mxu0 %v338
    %468 = vmatprep.subr.bf16.mxu0 %v341
    %469 = vmatpush1.bf16.msra.mxu0 %v340
    %470 = vmatprep.subr.bf16.mxu0 %v343
    %471 = vmatpush1.bf16.msra.mxu0 %v342
    %472 = vmatprep.subr.bf16.mxu0 %v345
    %473 = vmatpush1.bf16.msra.mxu0 %v344
    %474 = vmatprep.subr.bf16.mxu0 %v347
    %475 = vmatpush1.bf16.msra.mxu0 %v346
    %476 = vmatprep.subr.bf16.mxu0 %v349
    %477 = vmatpush1.bf16.msra.mxu0 %v348
    %478 = vmatprep.mubr.bf16.mxu0 %v119
    %479 = vmatmul.mubr.bf16.gmra.mrb[0].mxu0 %v118
    %v480 = vpop.f32.mrb[0].mxu0
    %v481 = vadd.f32 %v105, %v480
    %v482 = vpop.f32.mrb[0].mxu0
    %v483 = vadd.f32 %v109, %v482
    %v484 = vpop.f32.mrb[0].mxu0
    %v485 = vpop.f32.mrb[0].mxu0
    %486 = vdwg.mxu0
    %487 = vmatprep.subr.bf16.mxu0 %v351
    %488 = vmatpush1.bf16.msra.mxu0 %v350
    %489 = vmatprep.subr.bf16.mxu0 %v353
    %490 = vmatpush1.bf16.msra.mxu0 %v352
    %491 = vmatprep.subr.bf16.mxu0 %v355
    %492 = vmatpush1.bf16.msra.mxu0 %v354
    %493 = vmatprep.subr.bf16.mxu0 %v357
    %494 = vmatpush1.bf16.msra.mxu0 %v356
    %495 = vmatprep.subr.bf16.mxu0 %v359
    %496 = vmatpush1.bf16.msra.mxu0 %v358
    %497 = vmatprep.subr.bf16.mxu0 %v361
    %498 = vmatpush1.bf16.msra.mxu0 %v360
    %499 = vmatprep.subr.bf16.mxu0 %v363
    %500 = vmatpush1.bf16.msra.mxu0 %v362
    %501 = vmatprep.subr.bf16.mxu0 %v365
    %502 = vmatpush1.bf16.msra.mxu0 %v364
    %503 = vmatprep.subr.bf16.mxu0 %v367
    %504 = vmatpush1.bf16.msra.mxu0 %v366
    %505 = vmatprep.subr.bf16.mxu0 %v369
    %506 = vmatpush1.bf16.msra.mxu0 %v368
    %507 = vmatprep.subr.bf16.mxu0 %v371
    %508 = vmatpush1.bf16.msra.mxu0 %v370
    %509 = vmatprep.subr.bf16.mxu0 %v373
    %510 = vmatpush1.bf16.msra.mxu0 %v372
    %511 = vmatprep.subr.bf16.mxu0 %v375
    %512 = vmatpush1.bf16.msra.mxu0 %v374
    %513 = vmatprep.subr.bf16.mxu0 %v377
    %514 = vmatpush1.bf16.msra.mxu0 %v376
    %515 = vmatprep.subr.bf16.mxu0 %v379
    %516 = vmatpush1.bf16.msra.mxu0 %v378
    %517 = vmatprep.subr.bf16.mxu0 %v381
    %518 = vmatpush1.bf16.msra.mxu0 %v380
    %519 = vmatprep.mubr.bf16.mxu0 %v121
    %520 = vmatmul.mubr.bf16.gmra.mrb[0].mxu0 %v120
    %v521 = vpop.f32.mrb[0].mxu0
    %v522 = vadd.f32 %v481, %v521
    %v523 = vpop.f32.mrb[0].mxu0
    %v524 = vadd.f32 %v483, %v523
    %v525 = vpop.f32.mrb[0].mxu0
    %v526 = vpop.f32.mrb[0].mxu0
    %527 = vdwg.mxu0
    %528 = vst [vmem:[%s4] sm:$0xff] %v522
    %529 = vst [vmem:[%s4 + $0x8] sm:$0xff] %v524
    %v530 = vld [vmem:[%s3] sm:$0xff]
    %533 = vrot.lane.b32.xlu0 %v522, 47
    %v534 = vpop.permute.xlu0 %533
    %535 = vrot.lane.b32.xlu0 %v524, 47
    %v536 = vpop.permute.xlu0 %535
    %vm537 = vcmask 384000
    %v538 = vsel %vm537, %v534, %v536
    %v540 = vmax.f32 %v522, %v538
    %541 = vrot.lane.b32.xlu0 %v524, 94
    %v542 = vpop.permute.xlu0 %541
    %v544 = vmax.f32 %v540, %v542
    %v545 = vsub.f32 %v522, %v544
    %v546 = vmul.f32 %v545, 1.442695
    %v547 = vpow.pop %v546
    %549 = vrot.lane.b32.xlu0 %v544, 81
    %v550 = vpop.permute.xlu0 %549
    %v552 = vsub.f32 %v522, %v550
    %v553 = vsub.f32 %v524, %v550
    %v554 = vmul.f32 %v552, 1.442695
    %v555 = vpow.pop %v554
    %v556 = vmul.f32 %v553, 1.442695
    %v557 = vpow.pop %v556
    %560 = vrot.lane.b32.xlu0 %v555, 47
    %v561 = vpop.permute.xlu0 %560
    %562 = vrot.lane.b32.xlu0 %v557, 47
    %v563 = vpop.permute.xlu0 %562
    %v564 = vsel %vm537, %v561, %v563
    %v566 = vadd.f32 %v547, %v564
    %567 = vrot.lane.b32.xlu0 %v544, 34
    %v568 = vpop.permute.xlu0 %567
    %v570 = vsub.f32 %v524, %v568
    %v571 = vmul.f32 %v570, 1.442695
    %v572 = vpow.pop %v571
    %574 = vrot.lane.b32.xlu0 %v572, 94
    %v575 = vpop.permute.xlu0 %574
    %v577 = vadd.f32 %v566, %v575
    %v578 = vlog2.pop %v577
    %v579 = vmul.f32 %v578, 0.6931472
    %v580 = vadd.f32 %v544, %v579
    %vm581 = vcmp.eq.s32.totalorder %v530, 0
    %v582 = vsel %vm581, %v522, 0.0
    %vm583 = vcmp.eq.s32.totalorder %v530, 1
    %v584 = vsel %vm583, %v538, %v582
    %vm585 = vcmp.eq.s32.totalorder %v530, 2
    %v586 = vsel %vm585, %v542, %v584
    %vm587 = vcmp.ne.s32.totalorder %v530, 4294967196
    %v588 = vsub.f32 %v580, %v586
    %v589 = vsel %vm587, %v588, 0.0
    %vm590 = vcmask 662528
    %v591 = vsel %vm590, %v589, 0.0
    %592 = vadd.xlane.f32.xlu0 %v591
    %v593 = vpop.xlane.xlu0 %592
    %v594 = vrot.slane %v593, 4
    %v595 = vadd.f32 %v593, %v594
    %v596 = vrot.slane %v595, 2
    %v597 = vadd.f32 %v595, %v596
    %v598 = vrot.slane %v597, 1
    %v599 = vadd.f32 %v597, %v598
    %s600 = vtos %v599
    %v601 = vsel %vm587, 1, 0
    %v602 = vcvt.s32.f32 %v601
    %v603 = vsel %vm590, %v602, 0.0
    %604 = vadd.xlane.f32.xlu0 %v603
    %v605 = vpop.xlane.xlu0 %604
    %v606 = vrot.slane %v605, 4
    %v607 = vadd.f32 %v605, %v606
    %v608 = vrot.slane %v607, 2
    %v609 = vadd.f32 %v607, %v608
    %v610 = vrot.slane %v609, 1
    %v611 = vadd.f32 %v609, %v610
    %s612 = vtos %v611
    %v613 = vstv %s600
    %614 = vst [vmem:[%s5] sm:$0xff] %v613
    %v615 = vstv %s612
    %616 = vst [vmem:[%s6] sm:$0xff] %v615
    // Predicated region
    $region22: #{linear_probe_logits_and_loss.1} parent=1 // pred_check
      _
    $region23: #{linear_probe_logits_and_loss.1} parent=1 // pred_check_branch
      %618 = sbr.rel (0) target = $region25
    $region24: #{linear_probe_logits_and_loss.1} parent=1 // pred_region
      _
    $region25: #{linear_probe_logits_and_loss.1} parent=1 // pred_fallthru
      _
    // Predicated region
    $region26: #{linear_probe_logits_and_loss.1} parent=1 // pred_check
      _
    $region27: #{linear_probe_logits_and_loss.1} parent=1 // pred_check_branch
      %620 = sbr.rel (0) target = $region29
    $region28: #{linear_probe_logits_and_loss.1} parent=1 // pred_region
      _
    $region29: #{linear_probe_logits_and_loss.1} parent=1 // pred_fallthru
      _
    // Predicated region
    $region30: #{linear_probe_logits_and_loss.1} parent=1 // pred_check
      _
    $region31: #{linear_probe_logits_and_loss.1} parent=1 // pred_check_branch
      %622 = sbr.rel (0) target = $region33
    $region32: #{linear_probe_logits_and_loss.1} parent=1 // pred_region
      _
    $region33: #{linear_probe_logits_and_loss.1} parent=1 // pred_fallthru
      _
    // Predicated region
    $region34: #{linear_probe_logits_and_loss.1} parent=1 // pred_check
      _
    $region35: #{linear_probe_logits_and_loss.1} parent=1 // pred_check_branch
      %624 = sbr.rel (0) target = $region37
    $region36: #{linear_probe_logits_and_loss.1} parent=1 // pred_region
      _
    $region37: #{linear_probe_logits_and_loss.1} parent=1 // pred_fallthru
      _
    // Predicated region
    $region38: #{linear_probe_logits_and_loss.1} parent=1 // pred_check
      _
    $region39: #{linear_probe_logits_and_loss.1} parent=1 // pred_check_branch
      %626 = sbr.rel (0) target = $region41
    $region40: #{linear_probe_logits_and_loss.1} parent=1 // pred_region
      _
    $region41: #{linear_probe_logits_and_loss.1} parent=1 // pred_fallthru
      _
    // Predicated region
    $region42: #{linear_probe_logits_and_loss.1} parent=1 // pred_check
      _
    $region43: #{linear_probe_logits_and_loss.1} parent=1 // pred_check_branch
      %628 = sbr.rel (0) target = $region45
    $region44: #{linear_probe_logits_and_loss.1} parent=1 // pred_region
      _
    $region45: #{linear_probe_logits_and_loss.1} parent=1 // pred_fallthru
      _
    %629 = vsyncpa [#allocation3], 1

</llo_original>
